<compile_context>
chip_gen: v6e
topology: v6e:2x2x1
jax: 0.10.0
libtpu: 0.0.40
codegen_flags: <defaults>
</compile_context>

<pallas_src>
import math

import jax
import jax.numpy as jnp
from jax.experimental import pallas as pl
from jax.experimental.pallas import tpu as pltpu

EPS_LOGPROB = 1e-20          # clamp in log_prob_from_model_and_seq
LOG_EPS_LOGPROB = math.log(EPS_LOGPROB)
EPS_MEAN = 1e-5              # eps in masked_mean


def _dpo_logprob_kernel(tok_ref, mask_ref, sel_ref, emb_ref, w_ref, out_ref):
    # tok_ref : (1, 1, M)   int32  token ids of TB batch rows (M = TB*N), lane-dense
    # mask_ref: (1, 1, M)   f32    combined mask (seq_mask & ~prompt_mask), lane-dense
    # sel_ref : (M, TB)     f32    static row selector: sel[m, t] = 1 iff m // N == t
    # emb_ref : (1, D, V)   bf16   Embed^T of this param set
    # w_ref   : (1, V, D)   bf16   W_out^T of this param set
    # out_ref : (1, 1, 1, TB) f32  masked-mean token logprob per batch row
    V = emb_ref.shape[2]
    M = tok_ref.shape[2]
    TB = out_ref.shape[3]

    tok = tok_ref[0]                                        # (1, M) int32
    mask = mask_ref[0]                                      # (1, M) f32

    # Vocab one-hot with V on sublanes and token position on lanes.  Feeding it
    # to the MXU performs the embedding gather *inside* the kernel, so the
    # (R*N, D) activation tensor never round-trips through HBM.
    vocab = jax.lax.broadcasted_iota(jnp.int32, (V, M), 0)
    onehot = vocab == tok                                   # (V, M) bool

    # x^T = Embed^T @ onehot (gather; rows are exact bf16 embed values), then
    # logits^T = W_out^T @ x^T.  Both on the MXU, f32 accumulate.
    x_t = jnp.dot(emb_ref[0], onehot.astype(jnp.bfloat16),
                  preferred_element_type=jnp.float32)       # (D, M)
    logits_t = jnp.dot(w_ref[0], x_t.astype(jnp.bfloat16),
                       preferred_element_type=jnp.float32)  # (V, M) f32

    # Log-domain token logprob: logit_tok - max - log(sum exp).  The token logit
    # is taken from `logits_t` before the exp so only one (V, M) temp feeds the
    # exp -> sum (keeps live f32 temps minimal until V is tiled).
    tok_logit = jnp.sum(jnp.where(onehot, logits_t, 0.0),
                        axis=0, keepdims=True)              # (1, M)
    row_max = jnp.max(logits_t, axis=0, keepdims=True)      # (1, M)
    denom = jnp.sum(jnp.exp(logits_t - row_max),
                    axis=0, keepdims=True)                  # (1, M)
    logp = tok_logit - row_max - jnp.log(denom)             # (1, M) log p(token)
    logp = jnp.maximum(logp, LOG_EPS_LOGPROB)               # == log(clamp(p, eps))

    # Masked mean per batch row.  Segment sums go through the MXU with a static
    # 0/1 selector (tiny constant input, DMA'd once): data-dependent VPU work is
    # O(M), no (M, TB) select and no long cross-sublane reduce.
    sel = sel_ref[...]                                      # (M, TB) f32
    s = jnp.dot(logp * mask, sel, preferred_element_type=jnp.float32)   # (1, TB)
    total = jnp.dot(mask, sel, preferred_element_type=jnp.float32)      # (1, TB)
    mean = s / jnp.maximum(total, EPS_MEAN)
    mean = jnp.where(total < 0.5, 0.0, mean)                # mask entries are exactly 0/1
    out_ref[...] = mean.reshape(1, 1, 1, TB)                # leading-unit-dim reshape only


def _choose_rows_per_step(N):
    """Batch rows per grid step.

    M = TB*N is the lane dim of every in-kernel tile and the MXU free dim:
    target M ~ 256 lanes and, when cheap, round M up to a multiple of 128
    (vreg lane width).  Legality never depends on this choice because every
    tok/mask block equals its full (padded) array dims.
    """
    tb = max(1, pl.cdiv(256, N))
    bump = tb
    while (bump * N) % 128 != 0 and bump < 2 * tb:
        bump += 1
    if (bump * N) % 128 == 0:
        tb = bump
    return tb


def fused_masked_mean_logprob(policy_params, ref_params,
                              preferred_seq, unpreferred_seq,
                              pref_mask, unpref_mask):
    """One pallas_call computing all 4 masked-mean logprob vectors.

    Returns (policy_pref, policy_unpref, ref_pref, ref_unpref), each (B,).
    """
    p_embed, p_w = policy_params
    r_embed, r_w = ref_params
    B, N = preferred_seq.shape
    V, D = p_embed.shape
    assert p_w.shape == (D, V) and r_embed.shape == (V, D) and r_w.shape == (D, V)

    R = 2 * B
    seq_all = jnp.concatenate([preferred_seq, unpreferred_seq], axis=0).astype(jnp.int32)
    mask_all = jnp.concatenate([pref_mask, unpref_mask], axis=0).astype(jnp.float32)

    TB = _choose_rows_per_step(N)
    R_pad = pl.cdiv(R, TB) * TB
    if R_pad != R:  # padded rows: tok = 0, mask = 0 -> mean forced to 0, sliced off below
        seq_all = jnp.pad(seq_all, ((0, R_pad - R), (0, 0)))
        mask_all = jnp.pad(mask_all, ((0, R_pad - R), (0, 0)))
    num_chunks = R_pad // TB
    M = TB * N

    # Lane-dense token / mask streams: (chunk, 1, TB*N) with the long axis last.
    tok = seq_all.reshape(num_chunks, 1, M)
    msk = mask_all.reshape(num_chunks, 1, M)

    # Static row selector (data independent, fetched once): sel[m, t] = [m // N == t].
    sel = (jnp.arange(M, dtype=jnp.int32)[:, None] // N
           == jnp.arange(TB, dtype=jnp.int32)[None, :]).astype(jnp.float32)   # (M, TB)

    # Transposed bf16 parameters (tiny; cast once — no activation ever hits HBM).
    emb_t = jnp.stack([p_embed.T, r_embed.T], axis=0).astype(jnp.bfloat16)    # (2, D, V)
    w_t = jnp.stack([p_w.T, r_w.T], axis=0).astype(jnp.bfloat16)              # (2, V, D)

    out = pl.pallas_call(
        _dpo_logprob_kernel,
        out_shape=jax.ShapeDtypeStruct((2, num_chunks, 1, TB), jnp.float32),
        grid_spec=pltpu.PrefetchScalarGridSpec(
            num_scalar_prefetch=0,
            grid=(2, num_chunks),                       # (param_set, row_chunk)
            in_specs=[
                pl.BlockSpec((1, 1, M), lambda p, c: (c, 0, 0)),       # token ids
                pl.BlockSpec((1, 1, M), lambda p, c: (c, 0, 0)),       # mask
                pl.BlockSpec((M, TB), lambda p, c: (0, 0)),            # row selector (const)
                pl.BlockSpec((1, D, V), lambda p, c: (p, 0, 0)),       # Embed^T
                pl.BlockSpec((1, V, D), lambda p, c: (p, 0, 0)),       # W_out^T
            ],
            out_specs=pl.BlockSpec((1, 1, 1, TB), lambda p, c: (p, c, 0, 0)),
        ),
        compiler_params=pltpu.CompilerParams(
            dimension_semantics=("parallel", "parallel")),
    )(tok, msk, sel, emb_t, w_t)

    lp = out.reshape(2, R_pad)[:, :R]                                 # (2, 2B)
    policy_pref, policy_unpref = lp[0, :B], lp[0, B:R]
    ref_pref, ref_unpref = lp[1, :B], lp[1, B:R]
    return policy_pref, policy_unpref, ref_pref, ref_unpref


def dpo_forward(policy_params, ref_params, preferred_seq, unpreferred_seq,
                prompt_len, *, beta=0.1, pad_id=None):
    """Mirrors DPO.forward (Appendix B of https://arxiv.org/abs/2305.18290)."""
    B, N = preferred_seq.shape
    pos = jnp.arange(N, dtype=jnp.int32)
    prompt_mask = pos[None, :] < prompt_len[:, None]           # same for pref/unpref

    if pad_id is not None:
        pref_seq_mask = preferred_seq != pad_id
        preferred_seq = jnp.where(pref_seq_mask, preferred_seq, 0)
        unpref_seq_mask = unpreferred_seq != pad_id
        unpreferred_seq = jnp.where(unpref_seq_mask, unpreferred_seq, 0)
    else:
        pref_seq_mask = jnp.ones_like(preferred_seq, dtype=bool)
        unpref_seq_mask = jnp.ones_like(unpreferred_seq, dtype=bool)

    pref_mask = pref_seq_mask & (~prompt_mask)
    unpref_mask = unpref_seq_mask & (~prompt_mask)

    (policy_preferred_logprob, policy_unpreferred_logprob,
     ref_preferred_logprob, ref_unpreferred_logprob) = fused_masked_mean_logprob(
        policy_params, ref_params, preferred_seq, unpreferred_seq,
        pref_mask, unpref_mask)

    policy_logratios = policy_preferred_logprob - policy_unpreferred_logprob
    ref_logratios = ref_preferred_logprob - ref_unpreferred_logprob

    losses = -jax.nn.log_sigmoid(beta * (policy_logratios - ref_logratios))
    return jnp.mean(losses)


if __name__ == "__main__":
    B, N, V, D = 2, 16, 128, 32
    pad_id = 1
    beta = 0.1

    key = jax.random.PRNGKey(0)
    k_emb, k_w, k_pref, k_unpref = jax.random.split(key, 4)

    # policy model parameters; ref model = deepcopy(policy) (identical weights)
    embed = jax.random.normal(k_emb, (V, D), dtype=jnp.float32) * 0.02
    w_out = jax.random.normal(k_w, (D, V), dtype=jnp.float32) * 0.02
    policy_params = (embed, w_out)
    ref_params = (embed.copy(), w_out.copy())   # deepcopy semantics

    # token sequences in [2, V), with trailing pad tokens to exercise masking
    preferred_seq = jax.random.randint(k_pref, (B, N), 2, V, dtype=jnp.int32)
    unpreferred_seq = jax.random.randint(k_unpref, (B, N), 2, V, dtype=jnp.int32)
    pos = jnp.arange(N, dtype=jnp.int32)
    preferred_seq = jnp.where(pos[None, :] >= N - 3, pad_id, preferred_seq)
    unpreferred_seq = jnp.where(pos[None, :] >= N - 2, pad_id, unpreferred_seq)

    prompt_len = jnp.array([3, 5], dtype=jnp.int32)

    loss = dpo_forward(policy_params, ref_params, preferred_seq, unpreferred_seq,
                       prompt_len, beta=beta, pad_id=pad_id)
    jax.block_until_ready(loss)
    print("KERNEL_OK")
</pallas_src>

<mosaic_0001>
module attributes {stable_mosaic.version = 11 : i64} {
  func.func @_dpo_logprob_kernel(%arg0: i32, %arg1: i32, %arg2: memref<1x1x256xi32, #tpu.memory_space<vmem>>, %arg3: memref<1x1x256xf32, #tpu.memory_space<vmem>>, %arg4: memref<256x16xf32, #tpu.memory_space<vmem>>, %arg5: memref<1x32x128xbf16, #tpu.memory_space<vmem>>, %arg6: memref<1x128x32xbf16, #tpu.memory_space<vmem>>, %arg7: memref<1x1x1x16xf32, #tpu.memory_space<vmem>>) attributes {dimension_semantics = [#tpu.dimension_semantics<parallel>, #tpu.dimension_semantics<parallel>], iteration_bounds = array<i64: 2, 1>, scalar_prefetch = 0 : i64, scratch_operands = 0 : i64, tpu.core_type = #tpu.core_type<tc>, window_params = [{transform_indices = @transform_0, window_bounds = array<i64: 1, 1, 256>}, {transform_indices = @transform_1, window_bounds = array<i64: 1, 1, 256>}, {pipeline_mode = #tpu.pipeline_mode<synchronous>, transform_indices = @transform_2, window_bounds = array<i64: 256, 16>}, {transform_indices = @transform_3, window_bounds = array<i64: 1, 32, 128>}, {transform_indices = @transform_4, window_bounds = array<i64: 1, 128, 32>}, {transform_indices = @transform_5, window_bounds = array<i64: 1, 1, 1, 16>}]} {
    %c0 = arith.constant 0 : index
    %c0_0 = arith.constant 0 : index
    %c0_1 = arith.constant 0 : index
    %0 = vector.load %arg2[%c0, %c0_0, %c0_1] : memref<1x1x256xi32, #tpu.memory_space<vmem>>, vector<1x1x256xi32>
    %1 = vector.shape_cast %0 : vector<1x1x256xi32> to vector<1x256xi32>
    %c0_2 = arith.constant 0 : index
    %c0_3 = arith.constant 0 : index
    %c0_4 = arith.constant 0 : index
    %2 = vector.load %arg3[%c0_2, %c0_3, %c0_4] : memref<1x1x256xf32, #tpu.memory_space<vmem>>, vector<1x1x256xf32>
    %3 = vector.shape_cast %2 : vector<1x1x256xf32> to vector<1x256xf32>
    %4 = tpu.iota {dimensions = array<i32: 0>} : vector<128x256xi32>
    %5 = vector.broadcast %1 : vector<1x256xi32> to vector<128x256xi32>
    %6 = arith.cmpi eq, %4, %5 : vector<128x256xi32>
    %c0_5 = arith.constant 0 : index
    %c0_6 = arith.constant 0 : index
    %c0_7 = arith.constant 0 : index
    %7 = vector.load %arg5[%c0_5, %c0_6, %c0_7] : memref<1x32x128xbf16, #tpu.memory_space<vmem>>, vector<1x32x128xbf16>
    %8 = vector.shape_cast %7 : vector<1x32x128xbf16> to vector<32x128xbf16>
    %9 = arith.extui %6 : vector<128x256xi1> to vector<128x256xi32>
    %10 = arith.sitofp %9 : vector<128x256xi32> to vector<128x256xf32>
    %11 = arith.truncf %10 : vector<128x256xf32> to vector<128x256xbf16>
    %cst = arith.constant dense<0.000000e+00> : vector<32x256xf32>
    %12 = tpu.matmul %8, %11, %cst {dimension_numbers = #tpu.dot_dimension_numbers<[1], [0], [0], [1], [0, 0, 1, 1], [], []>} : vector<32x128xbf16>, vector<128x256xbf16>, vector<32x256xf32> -> vector<32x256xf32>
    %c0_8 = arith.constant 0 : index
    %c0_9 = arith.constant 0 : index
    %c0_10 = arith.constant 0 : index
    %13 = vector.load %arg6[%c0_8, %c0_9, %c0_10] : memref<1x128x32xbf16, #tpu.memory_space<vmem>>, vector<1x128x32xbf16>
    %14 = vector.shape_cast %13 : vector<1x128x32xbf16> to vector<128x32xbf16>
    %15 = arith.truncf %12 : vector<32x256xf32> to vector<32x256xbf16>
    %cst_11 = arith.constant dense<0.000000e+00> : vector<128x256xf32>
    %16 = tpu.matmul %14, %15, %cst_11 {dimension_numbers = #tpu.dot_dimension_numbers<[1], [0], [0], [1], [0, 0, 1, 1], [], []>} : vector<128x32xbf16>, vector<32x256xbf16>, vector<128x256xf32> -> vector<128x256xf32>
    %cst_12 = arith.constant 0.000000e+00 : f32
    %17 = vector.broadcast %cst_12 : f32 to vector<128x256xf32>
    %18 = arith.select %6, %16, %17 : vector<128x256xi1>, vector<128x256xf32>
    %cst_13 = arith.constant dense<0.000000e+00> : vector<256xf32>
    %19 = vector.multi_reduction <add>, %18, %cst_13 [0] : vector<128x256xf32> to vector<256xf32>
    %20 = vector.shape_cast %19 : vector<256xf32> to vector<1x256xf32>
    %cst_14 = arith.constant dense<0xFF800000> : vector<256xf32>
    %21 = vector.multi_reduction <maximumf>, %16, %cst_14 [0] : vector<128x256xf32> to vector<256xf32>
    %22 = vector.shape_cast %21 : vector<256xf32> to vector<1x256xf32>
    %23 = vector.broadcast %22 : vector<1x256xf32> to vector<128x256xf32>
    %24 = arith.subf %16, %23 : vector<128x256xf32>
    %25 = math.exp %24 : vector<128x256xf32>
    %cst_15 = arith.constant dense<0.000000e+00> : vector<256xf32>
    %26 = vector.multi_reduction <add>, %25, %cst_15 [0] : vector<128x256xf32> to vector<256xf32>
    %27 = vector.shape_cast %26 : vector<256xf32> to vector<1x256xf32>
    %28 = arith.subf %20, %22 : vector<1x256xf32>
    %29 = math.log %27 : vector<1x256xf32>
    %30 = arith.subf %28, %29 : vector<1x256xf32>
    %cst_16 = arith.constant -4.605170e+01 : f32
    %31 = vector.broadcast %cst_16 : f32 to vector<1x256xf32>
    %32 = arith.maximumf %30, %31 : vector<1x256xf32>
    %c0_17 = arith.constant 0 : index
    %c0_18 = arith.constant 0 : index
    %33 = vector.load %arg4[%c0_17, %c0_18] : memref<256x16xf32, #tpu.memory_space<vmem>>, vector<256x16xf32>
    %34 = arith.mulf %32, %3 : vector<1x256xf32>
    %cst_19 = arith.constant dense<0.000000e+00> : vector<1x16xf32>
    %35 = tpu.matmul %34, %33, %cst_19 {dimension_numbers = #tpu.dot_dimension_numbers<[1], [0], [0], [1], [0, 0, 1, 1], [], []>} : vector<1x256xf32>, vector<256x16xf32>, vector<1x16xf32> -> vector<1x16xf32>
    %cst_20 = arith.constant dense<0.000000e+00> : vector<1x16xf32>
    %36 = tpu.matmul %3, %33, %cst_20 {dimension_numbers = #tpu.dot_dimension_numbers<[1], [0], [0], [1], [0, 0, 1, 1], [], []>} : vector<1x256xf32>, vector<256x16xf32>, vector<1x16xf32> -> vector<1x16xf32>
    %cst_21 = arith.constant 9.99999974E-6 : f32
    %37 = vector.broadcast %cst_21 : f32 to vector<1x16xf32>
    %38 = arith.maximumf %36, %37 : vector<1x16xf32>
    %39 = arith.divf %35, %38 : vector<1x16xf32>
    %cst_22 = arith.constant 5.000000e-01 : f32
    %40 = vector.broadcast %cst_22 : f32 to vector<1x16xf32>
    %41 = arith.cmpf olt, %36, %40 : vector<1x16xf32>
    %cst_23 = arith.constant 0.000000e+00 : f32
    %42 = vector.broadcast %cst_23 : f32 to vector<1x16xf32>
    %43 = arith.select %41, %42, %39 : vector<1x16xi1>, vector<1x16xf32>
    %44 = vector.shape_cast %43 : vector<1x16xf32> to vector<1x1x1x16xf32>
    %c0_24 = arith.constant 0 : index
    %c0_25 = arith.constant 0 : index
    %c0_26 = arith.constant 0 : index
    %c0_27 = arith.constant 0 : index
    %45 = vector.load %arg7[%c0_24, %c0_25, %c0_26, %c0_27] : memref<1x1x1x16xf32, #tpu.memory_space<vmem>>, vector<1x1x1x16xf32>
    tpu.vector_store %arg7[%c0_24, %c0_25, %c0_26, %c0_27], %44 {strides = array<i32>} : memref<1x1x1x16xf32, #tpu.memory_space<vmem>>, vector<1x1x1x16xf32>,
    return
  }
  func.func @transform_0(%arg0: i32, %arg1: i32) -> (i32, i32, i32) {
    %c0_i32 = arith.constant 0 : i32
    %c0_i32_0 = arith.constant 0 : i32
    %c0_i32_1 = arith.constant 0 : i32
    return %arg1, %c0_i32, %c0_i32_0 : i32, i32, i32
  }
  func.func @transform_1(%arg0: i32, %arg1: i32) -> (i32, i32, i32) {
    %c0_i32 = arith.constant 0 : i32
    %c0_i32_0 = arith.constant 0 : i32
    %c0_i32_1 = arith.constant 0 : i32
    return %arg1, %c0_i32, %c0_i32_0 : i32, i32, i32
  }
  func.func @transform_2(%arg0: i32, %arg1: i32) -> (i32, i32) {
    %c0_i32 = arith.constant 0 : i32
    %c0_i32_0 = arith.constant 0 : i32
    %c0_i32_1 = arith.constant 0 : i32
    return %c0_i32, %c0_i32_0 : i32, i32
  }
  func.func @transform_3(%arg0: i32, %arg1: i32) -> (i32, i32, i32) {
    %c0_i32 = arith.constant 0 : i32
    %c0_i32_0 = arith.constant 0 : i32
    %c0_i32_1 = arith.constant 0 : i32
    return %arg0, %c0_i32, %c0_i32_0 : i32, i32, i32
  }
  func.func @transform_4(%arg0: i32, %arg1: i32) -> (i32, i32, i32) {
    %c0_i32 = arith.constant 0 : i32
    %c0_i32_0 = arith.constant 0 : i32
    %c0_i32_1 = arith.constant 0 : i32
    return %arg0, %c0_i32, %c0_i32_0 : i32, i32, i32
  }
  func.func @transform_5(%arg0: i32, %arg1: i32) -> (i32, i32, i32, i32) {
    %c0_i32 = arith.constant 0 : i32
    %c0_i32_0 = arith.constant 0 : i32
    %c0_i32_1 = arith.constant 0 : i32
    return %arg0, %arg1, %c0_i32, %c0_i32_0 : i32, i32, i32, i32
  }
}

</mosaic_0001>

<llo_original>
// kernel: tpu_custom_call.1
$region0: #{tpu_custom_call.1}
  #allocation0 [shape = 'u32[]', space=smem, size = 0x4, offset = 0x4, fixed_abs, tag = 'smem constant byte address 0x4 - core index']
  #allocation1 [shape = 'u32[144,128]{1,0:T(1,128)}', space=vmem, size = 0x12000, scoped, tag = 'internal scratch']
  %s0 = inlined_call_operand.vmem [shape: s32[1,1,256], index: 0, kind: input, shape index: {}]
  %s1 = inlined_call_operand.vmem [shape: f32[1,1,256], index: 1, kind: input, shape index: {}]
  %s2 = inlined_call_operand.vmem [shape: f32[256,16], index: 2, kind: input, shape index: {}]
  %s3 = inlined_call_operand.vmem [shape: bf16[2,32,128], index: 3, kind: input, shape index: {}]
  %s4 = inlined_call_operand.vmem [shape: bf16[2,128,32], index: 4, kind: input, shape index: {}]
  %s5 = inlined_call_operand.hbm [shape: f32[2,1,1,16], index: 5, kind: output, shape index: {}]
  %s6 = sld [smem:[#allocation0]]
  $region53: #{tpu_custom_call.1} parent=0
    _
  %s8 = ssub.s32 1, %s6
  %s9 = scalar_select 0, %s8, %s6
  $region1: #{tpu_custom_call.1} parent=0
    #allocation2 [shape = 'u8[1024]{0}', space=vmem, size = 0x400, scoped, tag = 'output window, operand 0']
    #allocation3 [shape = 's32[2]{0}', space=sflag, size = 0x8, scoped, tag = 'scoped memory for tpu_custom_call.1']
    %10 = vsyncpa [#allocation3], 0
    %s11 = scalar_lea.sflag [#allocation3], 1
    %12 = vsyncpa %s11, 0
    loop: start=0, step=1, limit=4
    $region2: #{tpu_custom_call.1} parent=1 // loop_pre_header
      _
    $region3: #{tpu_custom_call.1} parent=1 // loop_header
      %s14 = sphi 0, %s18
      %p15 = scmp.ge.s32.totalorder %s14, 4
      %s21 = sphi 0, %s33
      %s22 = sphi 0, %s29
      %s23 = sphi 0, %s21
      %s24 = sphi 0, %s22
      %s25 = sphi 0, %s23
      %s26 = sphi 0, %s24
      %s36 = sphi 0, %s38
      %s39 = sphi 0, %s36
      %s40 = sphi 0, %s39
      %s56 = sphi 0, %s40
      %s62 = sphi 0, %s64
      %s65 = sphi 0, %s62
      %s66 = sphi 0, %s65
      %s82 = sphi 0, %s66
      %s86 = sphi 0, %s86
      %s88 = sphi 0, %s86
      %s89 = sphi 0, %s88
      %s103 = sphi 0, %s89
      %s109 = sphi 0, %s111
      %s112 = sphi 0, %s109
      %s113 = sphi 0, %s112
      %s129 = sphi 0, %s113
      %s135 = sphi 0, %s137
      %s138 = sphi 0, %s135
      %s139 = sphi 0, %s138
      %s155 = sphi 0, %s139
      %s163 = sphi 0, %s165
      %s166 = sphi 0, %s163
      %s167 = sphi 0, %s166
      %s183 = sphi 0, %s167
    $region4: #{tpu_custom_call.1} parent=1 // loop_header_branch
      %17 = sbr.rel (%p15) target = $region8
    $region5: #{tpu_custom_call.1} parent=1 // loop_body
      %s19 = ssub.s32 %s14, 1
      %s20 = ssub.s32 %s14, 2
      %s27 = sadd.s32 1, %s22
      %p28 = scmp.ge.s32.totalorder %s27, 1
      %s29 = scalar_select %p28, 0, %s27
      %s30 = sadd.s32 1, %s21
      %s31 = scalar_select %p28, %s30, %s21
      %p32 = scmp.ge.s32.totalorder %s31, 2
      %s33 = scalar_select %p32, 0, %s31
      %s34 = ssub.s32 %s22, %s29
      %p35 = scmp.eq.s32.totalorder %s34, 0
      %s37 = sadd.s32 %s36, 1
      %s38 = scalar_select %p35, %s36, %s37
      %p41 = pneg %p35
      %p42 = scmp.eq.s32.totalorder %s14, 1
      %p43 = por %p41, %p42
      %p44 = scmp.ne.s32.totalorder %s36, %s39
      %p45 = scmp.eq.s32.totalorder %s14, 0
      %p46 = por %p44, %p45
      %p47 = scmp.ne.s32.totalorder %s36, %s39
      %p48 = scmp.eq.s32.totalorder %s19, 1
      %p49 = por %p47, %p48
      %p50 = scmp.ne.s32.totalorder %s39, %s40
      %p51 = scmp.eq.s32.totalorder %s19, 0
      %p52 = por %p50, %p51
      %p53 = scmp.ne.s32.totalorder %s39, %s40
      %p54 = scmp.eq.s32.totalorder %s20, 1
      %p55 = por %p53, %p54
      %p57 = scmp.ne.s32.totalorder %s40, %s56
      %p58 = scmp.eq.s32.totalorder %s20, 0
      %p59 = por %p57, %p58
      %s60 = ssub.s32 %s22, %s29
      %p61 = scmp.eq.s32.totalorder %s60, 0
      %s63 = sadd.s32 %s62, 1
      %s64 = scalar_select %p61, %s62, %s63
      %p67 = pneg %p61
      %p68 = scmp.eq.s32.totalorder %s14, 1
      %p69 = por %p67, %p68
      %p70 = scmp.ne.s32.totalorder %s62, %s65
      %p71 = scmp.eq.s32.totalorder %s14, 0
      %p72 = por %p70, %p71
      %p73 = scmp.ne.s32.totalorder %s62, %s65
      %p74 = scmp.eq.s32.totalorder %s19, 1
      %p75 = por %p73, %p74
      %p76 = scmp.ne.s32.totalorder %s65, %s66
      %p77 = scmp.eq.s32.totalorder %s19, 0
      %p78 = por %p76, %p77
      %p79 = scmp.ne.s32.totalorder %s65, %s66
      %p80 = scmp.eq.s32.totalorder %s20, 1
      %p81 = por %p79, %p80
      %p83 = scmp.ne.s32.totalorder %s66, %s82
      %p84 = scmp.eq.s32.totalorder %s20, 0
      %p85 = por %p83, %p84
      %s87 = sadd.s32 %s86, 1
      %p90 = scmp.eq.s32.totalorder %s14, 1
      %p91 = scmp.ne.s32.totalorder %s86, %s88
      %p92 = scmp.eq.s32.totalorder %s14, 0
      %p93 = por %p91, %p92
      %p94 = scmp.ne.s32.totalorder %s86, %s88
      %p95 = scmp.eq.s32.totalorder %s19, 1
      %p96 = por %p94, %p95
      %p97 = scmp.ne.s32.totalorder %s88, %s89
      %p98 = scmp.eq.s32.totalorder %s19, 0
      %p99 = por %p97, %p98
      %p100 = scmp.ne.s32.totalorder %s88, %s89
      %p101 = scmp.eq.s32.totalorder %s20, 1
      %p102 = por %p100, %p101
      %p104 = scmp.ne.s32.totalorder %s89, %s103
      %p105 = scmp.eq.s32.totalorder %s20, 0
      %p106 = por %p104, %p105
      %s107 = ssub.s32 %s21, %s33
      %p108 = scmp.eq.s32.totalorder %s107, 0
      %s110 = sadd.s32 %s109, 1
      %s111 = scalar_select %p108, %s109, %s110
      %p114 = pneg %p108
      %p115 = scmp.eq.s32.totalorder %s14, 1
      %p116 = por %p114, %p115
      %p117 = scmp.ne.s32.totalorder %s109, %s112
      %p118 = scmp.eq.s32.totalorder %s14, 0
      %p119 = por %p117, %p118
      %p120 = scmp.ne.s32.totalorder %s109, %s112
      %p121 = scmp.eq.s32.totalorder %s19, 1
      %p122 = por %p120, %p121
      %p123 = scmp.ne.s32.totalorder %s112, %s113
      %p124 = scmp.eq.s32.totalorder %s19, 0
      %p125 = por %p123, %p124
      %p126 = scmp.ne.s32.totalorder %s112, %s113
      %p127 = scmp.eq.s32.totalorder %s20, 1
      %p128 = por %p126, %p127
      %p130 = scmp.ne.s32.totalorder %s113, %s129
      %p131 = scmp.eq.s32.totalorder %s20, 0
      %p132 = por %p130, %p131
      %s133 = ssub.s32 %s21, %s33
      %p134 = scmp.eq.s32.totalorder %s133, 0
      %s136 = sadd.s32 %s135, 1
      %s137 = scalar_select %p134, %s135, %s136
      %p140 = pneg %p134
      %p141 = scmp.eq.s32.totalorder %s14, 1
      %p142 = por %p140, %p141
      %p143 = scmp.ne.s32.totalorder %s135, %s138
      %p144 = scmp.eq.s32.totalorder %s14, 0
      %p145 = por %p143, %p144
      %p146 = scmp.ne.s32.totalorder %s135, %s138
      %p147 = scmp.eq.s32.totalorder %s19, 1
      %p148 = por %p146, %p147
      %p149 = scmp.ne.s32.totalorder %s138, %s139
      %p150 = scmp.eq.s32.totalorder %s19, 0
      %p151 = por %p149, %p150
      %p152 = scmp.ne.s32.totalorder %s138, %s139
      %p153 = scmp.eq.s32.totalorder %s20, 1
      %p154 = por %p152, %p153
      %p156 = scmp.ne.s32.totalorder %s139, %s155
      %p157 = scmp.eq.s32.totalorder %s20, 0
      %p158 = por %p156, %p157
      %s159 = ssub.s32 %s21, %s33
      %s160 = ssub.s32 %s22, %s29
      %s161 = sor.u32 %s159, %s160
      %p162 = scmp.eq.s32.totalorder %s161, 0
      %s164 = sadd.s32 %s163, 1
      %s165 = scalar_select %p162, %s163, %s164
      %p168 = pneg %p162
      %p169 = scmp.eq.s32.totalorder %s14, 1
      %p170 = por %p168, %p169
      %p171 = scmp.ne.s32.totalorder %s163, %s166
      %p172 = scmp.eq.s32.totalorder %s14, 0
      %p173 = por %p171, %p172
      %p174 = scmp.ne.s32.totalorder %s163, %s166
      %p175 = scmp.eq.s32.totalorder %s19, 1
      %p176 = por %p174, %p175
      %p177 = scmp.ne.s32.totalorder %s166, %s167
      %p178 = scmp.eq.s32.totalorder %s19, 0
      %p179 = por %p177, %p178
      %p180 = scmp.ne.s32.totalorder %s166, %s167
      %p181 = scmp.eq.s32.totalorder %s20, 1
      %p182 = por %p180, %p181
      %p184 = scmp.ne.s32.totalorder %s167, %s183
      %p185 = scmp.eq.s32.totalorder %s20, 0
      %p186 = por %p184, %p185
      %p187 = scmp.le.s32.totalorder 1, %s14
      %p188 = scmp.lt.s32.totalorder %s14, 3
      %p189 = pnand %p187, %p188
      %p190 = pneg %p189
      // Predicated region
      $region9: #{tpu_custom_call.1} parent=5 // pred_check
        _
      $region10: #{tpu_custom_call.1} parent=5 // pred_check_branch
        %192 = sbr.rel (%p189) target = $region12
      $region11: #{tpu_custom_call.1} parent=5 // pred_region
        %s193 = ssub.s32 %s14, 1
        // Predicated region
        $region13: #{tpu_custom_call.1} parent=11 // pred_check
          %p194 = pneg %p52
        $region14: #{tpu_custom_call.1} parent=11 // pred_check_branch
          %196 = sbr.rel (%p194) target = $region16
        $region15: #{tpu_custom_call.1} parent=11 // pred_region
          %p197 = scmp.lt.s32.totalorder %s24, 0
          %s198 = scalar_select %p197, %s24, 0
          %s199 = smul.addr %s198, 2
          %s200 = scalar_lea.vmem %s0, %s199
        $region16: #{tpu_custom_call.1} parent=11 // pred_fallthru
          _
        // Predicated region
        $region17: #{tpu_custom_call.1} parent=11 // pred_check
          %p201 = pneg %p78
        $region18: #{tpu_custom_call.1} parent=11 // pred_check_branch
          %203 = sbr.rel (%p201) target = $region20
        $region19: #{tpu_custom_call.1} parent=11 // pred_region
          %p204 = scmp.lt.s32.totalorder %s24, 0
          %s205 = scalar_select %p204, %s24, 0
          %s206 = smul.addr %s205, 2
          %s207 = scalar_lea.vmem %s1, %s206
        $region20: #{tpu_custom_call.1} parent=11 // pred_fallthru
          _
        // Predicated region
        $region21: #{tpu_custom_call.1} parent=11 // pred_check
          %p208 = pneg %p99
        $region22: #{tpu_custom_call.1} parent=11 // pred_check_branch
          %210 = sbr.rel (%p208) target = $region24
        $region23: #{tpu_custom_call.1} parent=11 // pred_region
          _
        $region24: #{tpu_custom_call.1} parent=11 // pred_fallthru
          _
      $region12: #{tpu_custom_call.1} parent=5 // pred_fallthru
        _
      %p211 = scmp.lt.s32.totalorder %s14, 2
      // Predicated region
      $region25: #{tpu_custom_call.1} parent=5 // pred_check
        %p212 = pneg %p211
      $region26: #{tpu_custom_call.1} parent=5 // pred_check_branch
        %214 = sbr.rel (%p212) target = $region28
      $region27: #{tpu_custom_call.1} parent=5 // pred_region
        // Predicated region
        $region29: #{tpu_custom_call.1} parent=27 // pred_check
          %p215 = pneg %p119
        $region30: #{tpu_custom_call.1} parent=27 // pred_check_branch
          %217 = sbr.rel (%p215) target = $region32
        $region31: #{tpu_custom_call.1} parent=27 // pred_region
          %p218 = scmp.lt.s32.totalorder %s21, 1
          %s219 = scalar_select %p218, %s21, 1
          %s220 = smul.addr %s219, 4
          %s221 = smul.addr %s220, 4
          %s222 = scalar_lea.vmem %s3, %s221
        $region32: #{tpu_custom_call.1} parent=27 // pred_fallthru
          _
        // Predicated region
        $region33: #{tpu_custom_call.1} parent=27 // pred_check
          %p223 = pneg %p145
        $region34: #{tpu_custom_call.1} parent=27 // pred_check_branch
          %225 = sbr.rel (%p223) target = $region36
        $region35: #{tpu_custom_call.1} parent=27 // pred_region
          %p226 = scmp.lt.s32.totalorder %s21, 1
          %s227 = scalar_select %p226, %s21, 1
          %s228 = smul.addr %s227, 16
          %s229 = smul.addr %s228, 4
          %s230 = scalar_lea.vmem %s4, %s229
        $region36: #{tpu_custom_call.1} parent=27 // pred_fallthru
          _
      $region28: #{tpu_custom_call.1} parent=5 // pred_fallthru
        _
      %p231 = scmp.le.s32.totalorder 1, %s14
      %p232 = scmp.lt.s32.totalorder %s14, 3
      %p233 = pnand %p231, %p232
      %p234 = pneg %p233
      // Predicated region
      $region37: #{tpu_custom_call.1} parent=5 // pred_check
        _
      $region38: #{tpu_custom_call.1} parent=5 // pred_check_branch
        %236 = sbr.rel (%p233) target = $region40
      $region39: #{tpu_custom_call.1} parent=5 // pred_region
        %s237 = ssub.s32 %s14, 1
        %p238 = scmp.lt.s32.totalorder %s24, 0
        %s239 = scalar_select %p238, %s24, 0
        %s240 = smul.addr %s239, 2
        %s241 = scalar_lea.vmem %s0, %s240
        %p242 = pneg %p52
        %p243 = pneg %p49
        %p244 = scmp.lt.s32.totalorder %s24, 0
        %s245 = scalar_select %p244, %s24, 0
        %s246 = smul.addr %s245, 2
        %s247 = scalar_lea.vmem %s1, %s246
        %p248 = pneg %p78
        %p249 = pneg %p75
        %p250 = pneg %p99
        %p251 = pneg %p96
        %p252 = scmp.lt.s32.totalorder %s23, 1
        %s253 = scalar_select %p252, %s23, 1
        %s254 = smul.addr %s253, 4
        %s255 = smul.addr %s254, 4
        %s256 = scalar_lea.vmem %s3, %s255
        %p257 = pneg %p125
        %p258 = pneg %p122
        %p259 = scmp.lt.s32.totalorder %s23, 1
        %s260 = scalar_select %p259, %s23, 1
        %s261 = smul.addr %s260, 16
        %s262 = smul.addr %s261, 4
        %s263 = scalar_lea.vmem %s4, %s262
        %p264 = pneg %p151
        %p265 = pneg %p148
        %p266 = pneg %p179
        %p267 = pneg %p176
        %s268 = sand.u32 %s166, 1
        %s269 = scalar_lea.sflag [#allocation3], %s268
        %s270 = sand.u32 %s166, 1
        %s271 = scalar_lea.vmem [#allocation2], %s270
        %p272 = scmp.lt.s32.totalorder %s24, 0
        %s273 = scalar_select %p272, %s24, 0
        %s274 = smul.addr %s273, 2
        %s275 = scalar_lea.vmem %s0, %s274
        %p276 = scmp.lt.s32.totalorder %s24, 0
        %s277 = scalar_select %p276, %s24, 0
        %s278 = smul.addr %s277, 2
        %s279 = scalar_lea.vmem %s1, %s278
        %p280 = scmp.lt.s32.totalorder %s23, 1
        %s281 = scalar_select %p280, %s23, 1
        %s282 = smul.addr %s281, 4
        %s283 = smul.addr %s282, 4
        %s284 = scalar_lea.vmem %s3, %s283
        %p285 = scmp.lt.s32.totalorder %s23, 1
        %s286 = scalar_select %p285, %s23, 1
        %s287 = smul.addr %s286, 16
        %s288 = smul.addr %s287, 4
        %s289 = scalar_lea.vmem %s4, %s288
        %v291 = vld [vmem:[%s275] sm:$0x3]
        %v292 = vld [vmem:[%s279] sm:$0x3]
        %v293 = vlaneseq
        %v294 = vshrl.u32 %v293, 7
        %v295 = vadd.s32 %v294, 8
        %v296 = vadd.s32 %v294, 16
        %v297 = vadd.s32 %v294, 24
        %v298 = vadd.s32 %v294, 32
        %v299 = vadd.s32 %v294, 40
        %v300 = vadd.s32 %v294, 48
        %v301 = vadd.s32 %v294, 56
        %v302 = vadd.s32 %v294, 64
        %v303 = vadd.s32 %v294, 72
        %v304 = vadd.s32 %v294, 80
        %v305 = vadd.s32 %v294, 88
        %v306 = vadd.s32 %v294, 96
        %v307 = vadd.s32 %v294, 104
        %v308 = vadd.s32 %v294, 112
        %v309 = vadd.s32 %v294, 120
        %v310 = vlaneseq
        %v311 = vshrl.u32 %v310, 7
        %v312 = vsub.s32 0, %v311
        %v313 = vrot.slane %v291, %v312
        %v314 = vlaneseq
        %v315 = vshrl.u32 %v314, 7
        %v316 = vsub.s32 1, %v315
        %v317 = vrot.slane %v291, %v316
        %vm318 = vcmp.eq.s32.totalorder %v294, %v313
        %vm319 = vcmp.eq.s32.totalorder %v294, %v317
        %vm320 = vcmp.eq.s32.totalorder %v295, %v313
        %vm321 = vcmp.eq.s32.totalorder %v295, %v317
        %vm322 = vcmp.eq.s32.totalorder %v296, %v313
        %vm323 = vcmp.eq.s32.totalorder %v296, %v317
        %vm324 = vcmp.eq.s32.totalorder %v297, %v313
        %vm325 = vcmp.eq.s32.totalorder %v297, %v317
        %vm326 = vcmp.eq.s32.totalorder %v298, %v313
        %vm327 = vcmp.eq.s32.totalorder %v298, %v317
        %vm328 = vcmp.eq.s32.totalorder %v299, %v313
        %vm329 = vcmp.eq.s32.totalorder %v299, %v317
        %vm330 = vcmp.eq.s32.totalorder %v300, %v313
        %vm331 = vcmp.eq.s32.totalorder %v300, %v317
        %vm332 = vcmp.eq.s32.totalorder %v301, %v313
        %vm333 = vcmp.eq.s32.totalorder %v301, %v317
        %vm334 = vcmp.eq.s32.totalorder %v302, %v313
        %vm335 = vcmp.eq.s32.totalorder %v302, %v317
        %vm336 = vcmp.eq.s32.totalorder %v303, %v313
        %vm337 = vcmp.eq.s32.totalorder %v303, %v317
        %vm338 = vcmp.eq.s32.totalorder %v304, %v313
        %vm339 = vcmp.eq.s32.totalorder %v304, %v317
        %vm340 = vcmp.eq.s32.totalorder %v305, %v313
        %vm341 = vcmp.eq.s32.totalorder %v305, %v317
        %vm342 = vcmp.eq.s32.totalorder %v306, %v313
        %vm343 = vcmp.eq.s32.totalorder %v306, %v317
        %vm344 = vcmp.eq.s32.totalorder %v307, %v313
        %vm345 = vcmp.eq.s32.totalorder %v307, %v317
        %vm346 = vcmp.eq.s32.totalorder %v308, %v313
        %vm347 = vcmp.eq.s32.totalorder %v308, %v317
        %vm348 = vcmp.eq.s32.totalorder %v309, %v313
        %vm349 = vcmp.eq.s32.totalorder %v309, %v317
        %v350 = vld [vmem:[%s284] sm:$0xf]
        %v351 = vld [vmem:[%s284 + $0x4] sm:$0xf]
        %v352 = vld [vmem:[%s284 + $0x8] sm:$0xf]
        %v353 = vld [vmem:[%s284 + $0xc] sm:$0xf]
        %v354 = vsel %vm318, 1, 0
        %v355 = vsel %vm319, 1, 0
        %v356 = vsel %vm320, 1, 0
        %v357 = vsel %vm321, 1, 0
        %v358 = vsel %vm322, 1, 0
        %v359 = vsel %vm323, 1, 0
        %v360 = vsel %vm324, 1, 0
        %v361 = vsel %vm325, 1, 0
        %v362 = vsel %vm326, 1, 0
        %v363 = vsel %vm327, 1, 0
        %v364 = vsel %vm328, 1, 0
        %v365 = vsel %vm329, 1, 0
        %v366 = vsel %vm330, 1, 0
        %v367 = vsel %vm331, 1, 0
        %v368 = vsel %vm332, 1, 0
        %v369 = vsel %vm333, 1, 0
        %v370 = vsel %vm334, 1, 0
        %v371 = vsel %vm335, 1, 0
        %v372 = vsel %vm336, 1, 0
        %v373 = vsel %vm337, 1, 0
        %v374 = vsel %vm338, 1, 0
        %v375 = vsel %vm339, 1, 0
        %v376 = vsel %vm340, 1, 0
        %v377 = vsel %vm341, 1, 0
        %v378 = vsel %vm342, 1, 0
        %v379 = vsel %vm343, 1, 0
        %v380 = vsel %vm344, 1, 0
        %v381 = vsel %vm345, 1, 0
        %v382 = vsel %vm346, 1, 0
        %v383 = vsel %vm347, 1, 0
        %v384 = vsel %vm348, 1, 0
        %v385 = vsel %vm349, 1, 0
        %v386 = vcvt.s32.f32 %v354
        %v387 = vcvt.s32.f32 %v355
        %v388 = vcvt.s32.f32 %v356
        %v389 = vcvt.s32.f32 %v357
        %v390 = vcvt.s32.f32 %v358
        %v391 = vcvt.s32.f32 %v359
        %v392 = vcvt.s32.f32 %v360
        %v393 = vcvt.s32.f32 %v361
        %v394 = vcvt.s32.f32 %v362
        %v395 = vcvt.s32.f32 %v363
        %v396 = vcvt.s32.f32 %v364
        %v397 = vcvt.s32.f32 %v365
        %v398 = vcvt.s32.f32 %v366
        %v399 = vcvt.s32.f32 %v367
        %v400 = vcvt.s32.f32 %v368
        %v401 = vcvt.s32.f32 %v369
        %v402 = vcvt.s32.f32 %v370
        %v403 = vcvt.s32.f32 %v371
        %v404 = vcvt.s32.f32 %v372
        %v405 = vcvt.s32.f32 %v373
        %v406 = vcvt.s32.f32 %v374
        %v407 = vcvt.s32.f32 %v375
        %v408 = vcvt.s32.f32 %v376
        %v409 = vcvt.s32.f32 %v377
        %v410 = vcvt.s32.f32 %v378
        %v411 = vcvt.s32.f32 %v379
        %v412 = vcvt.s32.f32 %v380
        %v413 = vcvt.s32.f32 %v381
        %v414 = vcvt.s32.f32 %v382
        %v415 = vcvt.s32.f32 %v383
        %v416 = vcvt.s32.f32 %v384
        %v417 = vcvt.s32.f32 %v385
        %v418 = vpack.c.bf16 %v388, %v386
        %v419 = vpack.c.bf16 %v389, %v387
        %v420 = vpack.c.bf16 %v392, %v390
        %v421 = vpack.c.bf16 %v393, %v391
        %v422 = vpack.c.bf16 %v396, %v394
        %v423 = vpack.c.bf16 %v397, %v395
        %v424 = vpack.c.bf16 %v400, %v398
        %v425 = vpack.c.bf16 %v401, %v399
        %v426 = vpack.c.bf16 %v404, %v402
        %v427 = vpack.c.bf16 %v405, %v403
        %v428 = vpack.c.bf16 %v408, %v406
        %v429 = vpack.c.bf16 %v409, %v407
        %v430 = vpack.c.bf16 %v412, %v410
        %v431 = vpack.c.bf16 %v413, %v411
        %v432 = vpack.c.bf16 %v416, %v414
        %v433 = vpack.c.bf16 %v417, %v415
        %v438 = vunpack.c.l.b16 %v350
        %v439 = vunpack.c.l.b16 %v351
        %v440 = vunpack.c.l.b16 %v352
        %v441 = vunpack.c.l.b16 %v353
        %v442 = vpack.c.b16 %v439, %v438
        %v443 = vpack.c.b16 %v441, %v440
        %446 = vmatprep.subr.bf16.mxu0 %v433
        %447 = vmatpush1.bf16.msra.mxu0 %v432
        %448 = vmatprep.subr.bf16.mxu0 %v431
        %449 = vmatpush1.bf16.msra.mxu0 %v430
        %450 = vmatprep.subr.bf16.mxu0 %v429
        %451 = vmatpush1.bf16.msra.mxu0 %v428
        %452 = vmatprep.subr.bf16.mxu0 %v427
        %453 = vmatpush1.bf16.msra.mxu0 %v426
        %454 = vmatprep.subr.bf16.mxu0 %v425
        %455 = vmatpush1.bf16.msra.mxu0 %v424
        %456 = vmatprep.subr.bf16.mxu0 %v423
        %457 = vmatpush1.bf16.msra.mxu0 %v422
        %458 = vmatprep.subr.bf16.mxu0 %v421
        %459 = vmatpush1.bf16.msra.mxu0 %v420
        %460 = vmatprep.subr.bf16.mxu0 %v419
        %461 = vmatpush1.bf16.msra.mxu0 %v418
        %462 = vmatprep.subr.bf16.mxu0 0
        %463 = vmatpush2.bf16.msra.mxu0 0
        %464 = vmatprep.subr.bf16.mxu0 0
        %465 = vmatpush2.bf16.msra.mxu0 0
        %466 = vmatprep.subr.bf16.mxu0 0
        %467 = vmatpush2.bf16.msra.mxu0 0
        %468 = vmatprep.subr.bf16.mxu0 0
        %469 = vmatpush2.bf16.msra.mxu0 0
        %470 = vmatprep.subr.bf16.mxu0 0
        %471 = vmatpush2.bf16.msra.mxu0 0
        %472 = vmatprep.subr.bf16.mxu0 0
        %473 = vmatpush2.bf16.msra.mxu0 0
        %474 = vmatprep.subr.bf16.mxu0 0
        %475 = vmatpush2.bf16.msra.mxu0 0
        %476 = vmatprep.subr.bf16.mxu0 0
        %477 = vmatpush2.bf16.msra.mxu0 0
        %478 = vmatprep.mubr.bf16.mxu0 0
        %479 = vmatmul.mubr.bf16.gmra.mxu0 %v442
        %v480 = vpop.f32.mrf.mxu0
        %v481 = vadd.f32 0.0, %v480
        %v482 = vpop.f32.mrf.mxu0
        %v483 = vadd.f32 0.0, %v482
        %v484 = vpop.f32.mrf.mxu0
        %v485 = vadd.f32 0.0, %v484
        %v486 = vpop.f32.mrf.mxu0
        %v487 = vadd.f32 0.0, %v486
        %488 = vmatprep.mubr.bf16.mxu0 0
        %489 = vmatmul.mubr.bf16.gmra.mxu0 %v443
        %v490 = vpop.f32.mrf.mxu0
        %v491 = vadd.f32 0.0, %v490
        %v492 = vpop.f32.mrf.mxu0
        %v493 = vadd.f32 0.0, %v492
        %v494 = vpop.f32.mrf.mxu0
        %v495 = vadd.f32 0.0, %v494
        %v496 = vpop.f32.mrf.mxu0
        %v497 = vadd.f32 0.0, %v496
        %498 = vdwg.mxu0
        %v499 = vld [vmem:[%s289] sm:$0xf]
        %v500 = vld [vmem:[%s289 + $0x4] sm:$0xf]
        %v501 = vld [vmem:[%s289 + $0x8] sm:$0xf]
        %v502 = vld [vmem:[%s289 + $0xc] sm:$0xf]
        %v503 = vld [vmem:[%s289 + $0x10] sm:$0xf]
        %v504 = vld [vmem:[%s289 + $0x14] sm:$0xf]
        %v505 = vld [vmem:[%s289 + $0x18] sm:$0xf]
        %v506 = vld [vmem:[%s289 + $0x1c] sm:$0xf]
        %v507 = vld [vmem:[%s289 + $0x20] sm:$0xf]
        %v508 = vld [vmem:[%s289 + $0x24] sm:$0xf]
        %v509 = vld [vmem:[%s289 + $0x28] sm:$0xf]
        %v510 = vld [vmem:[%s289 + $0x2c] sm:$0xf]
        %v511 = vld [vmem:[%s289 + $0x30] sm:$0xf]
        %v512 = vld [vmem:[%s289 + $0x34] sm:$0xf]
        %v513 = vld [vmem:[%s289 + $0x38] sm:$0xf]
        %v514 = vld [vmem:[%s289 + $0x3c] sm:$0xf]
        %v515 = vpack.c.bf16 %v485, %v481
        %v516 = vpack.c.bf16 %v487, %v483
        %v517 = vpack.c.bf16 %v495, %v491
        %v518 = vpack.c.bf16 %v497, %v493
        %v535 = vunpack.c.l.b16 %v499
        %v536 = vunpack.c.l.b16 %v500
        %v537 = vunpack.c.l.b16 %v501
        %v538 = vunpack.c.l.b16 %v502
        %v539 = vunpack.c.l.b16 %v503
        %v540 = vunpack.c.l.b16 %v504
        %v541 = vunpack.c.l.b16 %v505
        %v542 = vunpack.c.l.b16 %v506
        %v543 = vunpack.c.l.b16 %v507
        %v544 = vunpack.c.l.b16 %v508
        %v545 = vunpack.c.l.b16 %v509
        %v546 = vunpack.c.l.b16 %v510
        %v547 = vunpack.c.l.b16 %v511
        %v548 = vunpack.c.l.b16 %v512
        %v549 = vunpack.c.l.b16 %v513
        %v550 = vunpack.c.l.b16 %v514
        %v551 = vpack.c.b16 %v536, %v535
        %v552 = vpack.c.b16 %v538, %v537
        %v553 = vpack.c.b16 %v540, %v539
        %v554 = vpack.c.b16 %v542, %v541
        %v555 = vpack.c.b16 %v544, %v543
        %v556 = vpack.c.b16 %v546, %v545
        %v557 = vpack.c.b16 %v548, %v547
        %v558 = vpack.c.b16 %v550, %v549
        %vm559 = vcmask 261120
        %v561 = vsel %vm559, %v551, 0
        %v564 = vsel %vm559, %v552, 0
        %v567 = vsel %vm559, %v553, 0
        %v570 = vsel %vm559, %v554, 0
        %v573 = vsel %vm559, %v555, 0
        %v576 = vsel %vm559, %v556, 0
        %v579 = vsel %vm559, %v557, 0
        %v582 = vsel %vm559, %v558, 0
        %584 = vmatprep.subr.bf16.mxu0 0
        %585 = vmatpush1.bf16.msra.mxu0 0
        %586 = vmatprep.subr.bf16.mxu0 0
        %587 = vmatpush1.bf16.msra.mxu0 0
        %588 = vmatprep.subr.bf16.mxu0 0
        %589 = vmatpush1.bf16.msra.mxu0 0
        %590 = vmatprep.subr.bf16.mxu0 0
        %591 = vmatpush1.bf16.msra.mxu0 0
        %592 = vmatprep.subr.bf16.mxu0 0
        %593 = vmatpush1.bf16.msra.mxu0 0
        %594 = vmatprep.subr.bf16.mxu0 0
        %595 = vmatpush1.bf16.msra.mxu0 0
        %596 = vmatprep.subr.bf16.mxu0 %v518
        %597 = vmatpush1.bf16.msra.mxu0 %v517
        %598 = vmatprep.subr.bf16.mxu0 %v516
        %599 = vmatpush1.bf16.msra.mxu0 %v515
        %600 = vmatprep.subr.bf16.mxu0 0
        %601 = vmatpush2.bf16.msra.mxu0 0
        %602 = vmatprep.subr.bf16.mxu0 0
        %603 = vmatpush2.bf16.msra.mxu0 0
        %604 = vmatprep.subr.bf16.mxu0 0
        %605 = vmatpush2.bf16.msra.mxu0 0
        %606 = vmatprep.subr.bf16.mxu0 0
        %607 = vmatpush2.bf16.msra.mxu0 0
        %608 = vmatprep.subr.bf16.mxu0 0
        %609 = vmatpush2.bf16.msra.mxu0 0
        %610 = vmatprep.subr.bf16.mxu0 0
        %611 = vmatpush2.bf16.msra.mxu0 0
        %612 = vmatprep.subr.bf16.mxu0 0
        %613 = vmatpush2.bf16.msra.mxu0 0
        %614 = vmatprep.subr.bf16.mxu0 0
        %615 = vmatpush2.bf16.msra.mxu0 0
        %616 = vmatprep.mubr.bf16.mxu0 0
        %617 = vmatmul.mubr.bf16.gmra.mxu0 %v561
        %v618 = vpop.f32.mrf.mxu0
        %v619 = vadd.f32 0.0, %v618
        %v620 = vpop.f32.mrf.mxu0
        %v621 = vadd.f32 0.0, %v620
        %v622 = vpop.f32.mrf.mxu0
        %v623 = vadd.f32 0.0, %v622
        %v624 = vpop.f32.mrf.mxu0
        %v625 = vadd.f32 0.0, %v624
        %626 = vmatprep.mubr.bf16.mxu0 0
        %627 = vmatmul.mubr.bf16.gmra.mxu0 %v564
        %v628 = vpop.f32.mrf.mxu0
        %v629 = vadd.f32 0.0, %v628
        %v630 = vpop.f32.mrf.mxu0
        %v631 = vadd.f32 0.0, %v630
        %v632 = vpop.f32.mrf.mxu0
        %v633 = vadd.f32 0.0, %v632
        %v634 = vpop.f32.mrf.mxu0
        %v635 = vadd.f32 0.0, %v634
        %636 = vmatprep.mubr.bf16.mxu0 0
        %637 = vmatmul.mubr.bf16.gmra.mxu0 %v567
        %v638 = vpop.f32.mrf.mxu0
        %v639 = vadd.f32 0.0, %v638
        %v640 = vpop.f32.mrf.mxu0
        %v641 = vadd.f32 0.0, %v640
        %v642 = vpop.f32.mrf.mxu0
        %v643 = vadd.f32 0.0, %v642
        %v644 = vpop.f32.mrf.mxu0
        %v645 = vadd.f32 0.0, %v644
        %646 = vmatprep.mubr.bf16.mxu0 0
        %647 = vmatmul.mubr.bf16.gmra.mxu0 %v570
        %v648 = vpop.f32.mrf.mxu0
        %v649 = vadd.f32 0.0, %v648
        %v650 = vpop.f32.mrf.mxu0
        %v651 = vadd.f32 0.0, %v650
        %v652 = vpop.f32.mrf.mxu0
        %v653 = vadd.f32 0.0, %v652
        %v654 = vpop.f32.mrf.mxu0
        %v655 = vadd.f32 0.0, %v654
        %656 = vmatprep.mubr.bf16.mxu0 0
        %657 = vmatmul.mubr.bf16.gmra.mxu0 %v573
        %v658 = vpop.f32.mrf.mxu0
        %v659 = vadd.f32 0.0, %v658
        %v660 = vpop.f32.mrf.mxu0
        %v661 = vadd.f32 0.0, %v660
        %v662 = vpop.f32.mrf.mxu0
        %v663 = vadd.f32 0.0, %v662
        %v664 = vpop.f32.mrf.mxu0
        %v665 = vadd.f32 0.0, %v664
        %666 = vmatprep.mubr.bf16.mxu0 0
        %667 = vmatmul.mubr.bf16.gmra.mxu0 %v576
        %v668 = vpop.f32.mrf.mxu0
        %v669 = vadd.f32 0.0, %v668
        %v670 = vpop.f32.mrf.mxu0
        %v671 = vadd.f32 0.0, %v670
        %v672 = vpop.f32.mrf.mxu0
        %v673 = vadd.f32 0.0, %v672
        %v674 = vpop.f32.mrf.mxu0
        %v675 = vadd.f32 0.0, %v674
        %676 = vmatprep.mubr.bf16.mxu0 0
        %677 = vmatmul.mubr.bf16.gmra.mxu0 %v579
        %v678 = vpop.f32.mrf.mxu0
        %v679 = vadd.f32 0.0, %v678
        %v680 = vpop.f32.mrf.mxu0
        %v681 = vadd.f32 0.0, %v680
        %v682 = vpop.f32.mrf.mxu0
        %v683 = vadd.f32 0.0, %v682
        %v684 = vpop.f32.mrf.mxu0
        %v685 = vadd.f32 0.0, %v684
        %686 = vmatprep.mubr.bf16.mxu0 0
        %687 = vmatmul.mubr.bf16.gmra.mxu0 %v582
        %v688 = vpop.f32.mrf.mxu0
        %v689 = vadd.f32 0.0, %v688
        %v690 = vpop.f32.mrf.mxu0
        %v691 = vadd.f32 0.0, %v690
        %v692 = vpop.f32.mrf.mxu0
        %v693 = vadd.f32 0.0, %v692
        %v694 = vpop.f32.mrf.mxu0
        %v695 = vadd.f32 0.0, %v694
        %696 = vdwg.mxu0
        %v697 = vsel %vm318, %v619, 0.0
        %v698 = vsel %vm319, %v621, 0.0
        %v699 = vsel %vm320, %v623, 0.0
        %v700 = vsel %vm321, %v625, 0.0
        %v701 = vsel %vm322, %v629, 0.0
        %v702 = vsel %vm323, %v631, 0.0
        %v703 = vsel %vm324, %v633, 0.0
        %v704 = vsel %vm325, %v635, 0.0
        %v705 = vsel %vm326, %v639, 0.0
        %v706 = vsel %vm327, %v641, 0.0
        %v707 = vsel %vm328, %v643, 0.0
        %v708 = vsel %vm329, %v645, 0.0
        %v709 = vsel %vm330, %v649, 0.0
        %v710 = vsel %vm331, %v651, 0.0
        %v711 = vsel %vm332, %v653, 0.0
        %v712 = vsel %vm333, %v655, 0.0
        %v713 = vsel %vm334, %v659, 0.0
        %v714 = vsel %vm335, %v661, 0.0
        %v715 = vsel %vm336, %v663, 0.0
        %v716 = vsel %vm337, %v665, 0.0
        %v717 = vsel %vm338, %v669, 0.0
        %v718 = vsel %vm339, %v671, 0.0
        %v719 = vsel %vm340, %v673, 0.0
        %v720 = vsel %vm341, %v675, 0.0
        %v721 = vsel %vm342, %v679, 0.0
        %v722 = vsel %vm343, %v681, 0.0
        %v723 = vsel %vm344, %v683, 0.0
        %v724 = vsel %vm345, %v685, 0.0
        %v725 = vsel %vm346, %v689, 0.0
        %v726 = vsel %vm347, %v691, 0.0
        %v727 = vsel %vm348, %v693, 0.0
        %v728 = vsel %vm349, %v695, 0.0
        %v729 = vadd.f32 %v697, %v699
        %v730 = vadd.f32 %v729, %v701
        %v731 = vadd.f32 %v730, %v703
        %v732 = vadd.f32 %v731, %v705
        %v733 = vadd.f32 %v732, %v707
        %v734 = vadd.f32 %v733, %v709
        %v735 = vadd.f32 %v734, %v711
        %v736 = vadd.f32 %v735, %v713
        %v737 = vadd.f32 %v736, %v715
        %v738 = vadd.f32 %v737, %v717
        %v739 = vadd.f32 %v738, %v719
        %v740 = vadd.f32 %v739, %v721
        %v741 = vadd.f32 %v740, %v723
        %v742 = vadd.f32 %v741, %v725
        %v743 = vadd.f32 %v742, %v727
        %v744 = vrot.slane %v743, 4
        %v745 = vadd.f32 %v743, %v744
        %v746 = vrot.slane %v745, 2
        %v747 = vadd.f32 %v745, %v746
        %v748 = vrot.slane %v747, 1
        %v749 = vadd.f32 %v747, %v748
        %v750 = vadd.f32 %v698, %v700
        %v751 = vadd.f32 %v750, %v702
        %v752 = vadd.f32 %v751, %v704
        %v753 = vadd.f32 %v752, %v706
        %v754 = vadd.f32 %v753, %v708
        %v755 = vadd.f32 %v754, %v710
        %v756 = vadd.f32 %v755, %v712
        %v757 = vadd.f32 %v756, %v714
        %v758 = vadd.f32 %v757, %v716
        %v759 = vadd.f32 %v758, %v718
        %v760 = vadd.f32 %v759, %v720
        %v761 = vadd.f32 %v760, %v722
        %v762 = vadd.f32 %v761, %v724
        %v763 = vadd.f32 %v762, %v726
        %v764 = vadd.f32 %v763, %v728
        %v765 = vrot.slane %v764, 4
        %v766 = vadd.f32 %v764, %v765
        %v767 = vrot.slane %v766, 2
        %v768 = vadd.f32 %v766, %v767
        %v769 = vrot.slane %v768, 1
        %v770 = vadd.f32 %v768, %v769
        %v771 = vmax.f32 %v619, %v629
        %v772 = vmax.f32 %v623, %v633
        %v773 = vmax.f32 %v771, %v639
        %v774 = vmax.f32 %v772, %v643
        %v775 = vmax.f32 %v773, %v649
        %v776 = vmax.f32 %v774, %v653
        %v777 = vmax.f32 %v775, %v659
        %v778 = vmax.f32 %v776, %v663
        %v779 = vmax.f32 %v777, %v669
        %v780 = vmax.f32 %v778, %v673
        %v781 = vmax.f32 %v779, %v679
        %v782 = vmax.f32 %v780, %v683
        %v783 = vmax.f32 %v781, %v689
        %v784 = vmax.f32 %v782, %v693
        %v785 = vmax.f32 %v783, %v784
        %v786 = vrot.slane %v785, 4
        %v787 = vmax.f32 %v785, %v786
        %v788 = vrot.slane %v787, 2
        %v789 = vmax.f32 %v787, %v788
        %v790 = vrot.slane %v789, 1
        %v791 = vmax.f32 %v789, %v790
        %v792 = vmax.f32 %v621, %v631
        %v793 = vmax.f32 %v625, %v635
        %v794 = vmax.f32 %v792, %v641
        %v795 = vmax.f32 %v793, %v645
        %v796 = vmax.f32 %v794, %v651
        %v797 = vmax.f32 %v795, %v655
        %v798 = vmax.f32 %v796, %v661
        %v799 = vmax.f32 %v797, %v665
        %v800 = vmax.f32 %v798, %v671
        %v801 = vmax.f32 %v799, %v675
        %v802 = vmax.f32 %v800, %v681
        %v803 = vmax.f32 %v801, %v685
        %v804 = vmax.f32 %v802, %v691
        %v805 = vmax.f32 %v803, %v695
        %v806 = vmax.f32 %v804, %v805
        %v807 = vrot.slane %v806, 4
        %v808 = vmax.f32 %v806, %v807
        %v809 = vrot.slane %v808, 2
        %v810 = vmax.f32 %v808, %v809
        %v811 = vrot.slane %v810, 1
        %v812 = vmax.f32 %v810, %v811
        %v813 = vsub.f32 %v619, %v791
        %v814 = vsub.f32 %v621, %v812
        %v815 = vsub.f32 %v623, %v791
        %v816 = vsub.f32 %v625, %v812
        %v817 = vsub.f32 %v629, %v791
        %v818 = vsub.f32 %v631, %v812
        %v819 = vsub.f32 %v633, %v791
        %v820 = vsub.f32 %v635, %v812
        %v821 = vsub.f32 %v639, %v791
        %v822 = vsub.f32 %v641, %v812
        %v823 = vsub.f32 %v643, %v791
        %v824 = vsub.f32 %v645, %v812
        %v825 = vsub.f32 %v649, %v791
        %v826 = vsub.f32 %v651, %v812
        %v827 = vsub.f32 %v653, %v791
        %v828 = vsub.f32 %v655, %v812
        %v829 = vsub.f32 %v659, %v791
        %v830 = vsub.f32 %v661, %v812
        %v831 = vsub.f32 %v663, %v791
        %v832 = vsub.f32 %v665, %v812
        %v833 = vsub.f32 %v669, %v791
        %v834 = vsub.f32 %v671, %v812
        %v835 = vsub.f32 %v673, %v791
        %v836 = vsub.f32 %v675, %v812
        %v837 = vsub.f32 %v679, %v791
        %v838 = vsub.f32 %v681, %v812
        %v839 = vsub.f32 %v683, %v791
        %v840 = vsub.f32 %v685, %v812
        %v841 = vsub.f32 %v689, %v791
        %v842 = vsub.f32 %v691, %v812
        %v843 = vsub.f32 %v693, %v791
        %v844 = vsub.f32 %v695, %v812
        %v845 = vmul.f32 %v813, 1.442695
        %v846 = vpow.pop %v845
        %v847 = vmul.f32 %v814, 1.442695
        %v848 = vpow.pop %v847
        %v849 = vmul.f32 %v815, 1.442695
        %v850 = vpow.pop %v849
        %v851 = vmul.f32 %v816, 1.442695
        %v852 = vpow.pop %v851
        %v853 = vmul.f32 %v817, 1.442695
        %v854 = vpow.pop %v853
        %v855 = vmul.f32 %v818, 1.442695
        %v856 = vpow.pop %v855
        %v857 = vmul.f32 %v819, 1.442695
        %v858 = vpow.pop %v857
        %v859 = vmul.f32 %v820, 1.442695
        %v860 = vpow.pop %v859
        %v861 = vmul.f32 %v821, 1.442695
        %v862 = vpow.pop %v861
        %v863 = vmul.f32 %v822, 1.442695
        %v864 = vpow.pop %v863
        %v865 = vmul.f32 %v823, 1.442695
        %v866 = vpow.pop %v865
        %v867 = vmul.f32 %v824, 1.442695
        %v868 = vpow.pop %v867
        %v869 = vmul.f32 %v825, 1.442695
        %v870 = vpow.pop %v869
        %v871 = vmul.f32 %v826, 1.442695
        %v872 = vpow.pop %v871
        %v873 = vmul.f32 %v827, 1.442695
        %v874 = vpow.pop %v873
        %v875 = vmul.f32 %v828, 1.442695
        %v876 = vpow.pop %v875
        %v877 = vmul.f32 %v829, 1.442695
        %v878 = vpow.pop %v877
        %v879 = vmul.f32 %v830, 1.442695
        %v880 = vpow.pop %v879
        %v881 = vmul.f32 %v831, 1.442695
        %v882 = vpow.pop %v881
        %v883 = vmul.f32 %v832, 1.442695
        %v884 = vpow.pop %v883
        %v885 = vmul.f32 %v833, 1.442695
        %v886 = vpow.pop %v885
        %v887 = vmul.f32 %v834, 1.442695
        %v888 = vpow.pop %v887
        %v889 = vmul.f32 %v835, 1.442695
        %v890 = vpow.pop %v889
        %v891 = vmul.f32 %v836, 1.442695
        %v892 = vpow.pop %v891
        %v893 = vmul.f32 %v837, 1.442695
        %v894 = vpow.pop %v893
        %v895 = vmul.f32 %v838, 1.442695
        %v896 = vpow.pop %v895
        %v897 = vmul.f32 %v839, 1.442695
        %v898 = vpow.pop %v897
        %v899 = vmul.f32 %v840, 1.442695
        %v900 = vpow.pop %v899
        %v901 = vmul.f32 %v841, 1.442695
        %v902 = vpow.pop %v901
        %v903 = vmul.f32 %v842, 1.442695
        %v904 = vpow.pop %v903
        %v905 = vmul.f32 %v843, 1.442695
        %v906 = vpow.pop %v905
        %v907 = vmul.f32 %v844, 1.442695
        %v908 = vpow.pop %v907
        %v909 = vadd.f32 %v846, %v850
        %v910 = vadd.f32 %v909, %v854
        %v911 = vadd.f32 %v910, %v858
        %v912 = vadd.f32 %v911, %v862
        %v913 = vadd.f32 %v912, %v866
        %v914 = vadd.f32 %v913, %v870
        %v915 = vadd.f32 %v914, %v874
        %v916 = vadd.f32 %v915, %v878
        %v917 = vadd.f32 %v916, %v882
        %v918 = vadd.f32 %v917, %v886
        %v919 = vadd.f32 %v918, %v890
        %v920 = vadd.f32 %v919, %v894
        %v921 = vadd.f32 %v920, %v898
        %v922 = vadd.f32 %v921, %v902
        %v923 = vadd.f32 %v922, %v906
        %v924 = vrot.slane %v923, 4
        %v925 = vadd.f32 %v923, %v924
        %v926 = vrot.slane %v925, 2
        %v927 = vadd.f32 %v925, %v926
        %v928 = vrot.slane %v927, 1
        %v929 = vadd.f32 %v927, %v928
        %v930 = vadd.f32 %v848, %v852
        %v931 = vadd.f32 %v930, %v856
        %v932 = vadd.f32 %v931, %v860
        %v933 = vadd.f32 %v932, %v864
        %v934 = vadd.f32 %v933, %v868
        %v935 = vadd.f32 %v934, %v872
        %v936 = vadd.f32 %v935, %v876
        %v937 = vadd.f32 %v936, %v880
        %v938 = vadd.f32 %v937, %v884
        %v939 = vadd.f32 %v938, %v888
        %v940 = vadd.f32 %v939, %v892
        %v941 = vadd.f32 %v940, %v896
        %v942 = vadd.f32 %v941, %v900
        %v943 = vadd.f32 %v942, %v904
        %v944 = vadd.f32 %v943, %v908
        %v945 = vrot.slane %v944, 4
        %v946 = vadd.f32 %v944, %v945
        %v947 = vrot.slane %v946, 2
        %v948 = vadd.f32 %v946, %v947
        %v949 = vrot.slane %v948, 1
        %v950 = vadd.f32 %v948, %v949
        %v951 = vsub.f32 %v749, %v791
        %v952 = vsub.f32 %v770, %v812
        %v953 = vlog2.pop %v929
        %v954 = vmul.f32 %v953, 0.6931472
        %v955 = vlog2.pop %v950
        %v956 = vmul.f32 %v955, 0.6931472
        %v957 = vsub.f32 %v951, %v954
        %v958 = vsub.f32 %v952, %v956
        %v959 = vmax.f32 %v957, -46.0517
        %v960 = vmax.f32 %v958, -46.0517
        %v961 = vld [vmem:[%s2] sm:$0xff]
        %v962 = vld [vmem:[%s2 + $0x8] sm:$0xff]
        %v963 = vld [vmem:[%s2 + $0x10] sm:$0xff]
        %v964 = vld [vmem:[%s2 + $0x18] sm:$0xff]
        %v965 = vld [vmem:[%s2 + $0x20] sm:$0xff]
        %v966 = vld [vmem:[%s2 + $0x28] sm:$0xff]
        %v967 = vld [vmem:[%s2 + $0x30] sm:$0xff]
        %v968 = vld [vmem:[%s2 + $0x38] sm:$0xff]
        %v969 = vld [vmem:[%s2 + $0x40] sm:$0xff]
        %v970 = vld [vmem:[%s2 + $0x48] sm:$0xff]
        %v971 = vld [vmem:[%s2 + $0x50] sm:$0xff]
        %v972 = vld [vmem:[%s2 + $0x58] sm:$0xff]
        %v973 = vld [vmem:[%s2 + $0x60] sm:$0xff]
        %v974 = vld [vmem:[%s2 + $0x68] sm:$0xff]
        %v975 = vld [vmem:[%s2 + $0x70] sm:$0xff]
        %v976 = vld [vmem:[%s2 + $0x78] sm:$0xff]
        %v977 = vld [vmem:[%s2 + $0x80] sm:$0xff]
        %v978 = vld [vmem:[%s2 + $0x88] sm:$0xff]
        %v979 = vld [vmem:[%s2 + $0x90] sm:$0xff]
        %v980 = vld [vmem:[%s2 + $0x98] sm:$0xff]
        %v981 = vld [vmem:[%s2 + $0xa0] sm:$0xff]
        %v982 = vld [vmem:[%s2 + $0xa8] sm:$0xff]
        %v983 = vld [vmem:[%s2 + $0xb0] sm:$0xff]
        %v984 = vld [vmem:[%s2 + $0xb8] sm:$0xff]
        %v985 = vld [vmem:[%s2 + $0xc0] sm:$0xff]
        %v986 = vld [vmem:[%s2 + $0xc8] sm:$0xff]
        %v987 = vld [vmem:[%s2 + $0xd0] sm:$0xff]
        %v988 = vld [vmem:[%s2 + $0xd8] sm:$0xff]
        %v989 = vld [vmem:[%s2 + $0xe0] sm:$0xff]
        %v990 = vld [vmem:[%s2 + $0xe8] sm:$0xff]
        %v991 = vld [vmem:[%s2 + $0xf0] sm:$0xff]
        %v992 = vld [vmem:[%s2 + $0xf8] sm:$0xff]
        %v994 = vlaneseq
        %v995 = vshrl.u32 %v994, 7
        %v996 = vsub.s32 0, %v995
        %v997 = vrot.slane %v292, %v996
        %v998 = vlaneseq
        %v999 = vshrl.u32 %v998, 7
        %v1000 = vsub.s32 1, %v999
        %v1001 = vrot.slane %v292, %v1000
        %v1004 = vmul.f32 %v959, %v997
        %v1005 = vmul.f32 %v960, %v1001
        %1006 = vmatprep.subr.mxu0 0.0
        %1007 = vmatpush1.msra.mxu0 %v976
        %1008 = vmatprep.subr.mxu0 0.0
        %1009 = vmatpush1.msra.mxu0 %v975
        %1010 = vmatprep.subr.mxu0 0.0
        %1011 = vmatpush1.msra.mxu0 %v974
        %1012 = vmatprep.subr.mxu0 0.0
        %1013 = vmatpush1.msra.mxu0 %v973
        %1014 = vmatprep.subr.mxu0 0.0
        %1015 = vmatpush1.msra.mxu0 %v972
        %1016 = vmatprep.subr.mxu0 0.0
        %1017 = vmatpush1.msra.mxu0 %v971
        %1018 = vmatprep.subr.mxu0 0.0
        %1019 = vmatpush1.msra.mxu0 %v970
        %1020 = vmatprep.subr.mxu0 0.0
        %1021 = vmatpush1.msra.mxu0 %v969
        %1022 = vmatprep.subr.mxu0 0.0
        %1023 = vmatpush1.msra.mxu0 %v968
        %1024 = vmatprep.subr.mxu0 0.0
        %1025 = vmatpush1.msra.mxu0 %v967
        %1026 = vmatprep.subr.mxu0 0.0
        %1027 = vmatpush1.msra.mxu0 %v966
        %1028 = vmatprep.subr.mxu0 0.0
        %1029 = vmatpush1.msra.mxu0 %v965
        %1030 = vmatprep.subr.mxu0 0.0
        %1031 = vmatpush1.msra.mxu0 %v964
        %1032 = vmatprep.subr.mxu0 0.0
        %1033 = vmatpush1.msra.mxu0 %v963
        %1034 = vmatprep.subr.mxu0 0.0
        %1035 = vmatpush1.msra.mxu0 %v962
        %1036 = vmatprep.subr.mxu0 0.0
        %1037 = vmatpush1.msra.mxu0 %v961
        %1038 = vmatprep.subr.mxu0 0.0
        %1039 = vmatpush2.msra.mxu0 %v992
        %1040 = vmatprep.subr.mxu0 0.0
        %1041 = vmatpush2.msra.mxu0 %v991
        %1042 = vmatprep.subr.mxu0 0.0
        %1043 = vmatpush2.msra.mxu0 %v990
        %1044 = vmatprep.subr.mxu0 0.0
        %1045 = vmatpush2.msra.mxu0 %v989
        %1046 = vmatprep.subr.mxu0 0.0
        %1047 = vmatpush2.msra.mxu0 %v988
        %1048 = vmatprep.subr.mxu0 0.0
        %1049 = vmatpush2.msra.mxu0 %v987
        %1050 = vmatprep.subr.mxu0 0.0
        %1051 = vmatpush2.msra.mxu0 %v986
        %1052 = vmatprep.subr.mxu0 0.0
        %1053 = vmatpush2.msra.mxu0 %v985
        %1054 = vmatprep.subr.mxu0 0.0
        %1055 = vmatpush2.msra.mxu0 %v984
        %1056 = vmatprep.subr.mxu0 0.0
        %1057 = vmatpush2.msra.mxu0 %v983
        %1058 = vmatprep.subr.mxu0 0.0
        %1059 = vmatpush2.msra.mxu0 %v982
        %1060 = vmatprep.subr.mxu0 0.0
        %1061 = vmatpush2.msra.mxu0 %v981
        %1062 = vmatprep.subr.mxu0 0.0
        %1063 = vmatpush2.msra.mxu0 %v980
        %1064 = vmatprep.subr.mxu0 0.0
        %1065 = vmatpush2.msra.mxu0 %v979
        %1066 = vmatprep.subr.mxu0 0.0
        %1067 = vmatpush2.msra.mxu0 %v978
        %1068 = vmatprep.subr.mxu0 0.0
        %1069 = vmatpush2.msra.mxu0 %v977
        %1070 = vmatprep.mubr.f32.mxu0 %v1005
        %1071 = vmatmul.mubr.f32.gmra.mxu0 %v1004
        %v1072 = vpop.f32.mrf.mxu0
        %v1073 = vadd.f32 0.0, %v1072
        %v1074 = vpop.f32.mrf.mxu0
        %1075 = vdwg.mxu0
        %1076 = vmatprep.subr.mxu0 0.0
        %1077 = vmatpush1.msra.mxu0 %v976
        %1078 = vmatprep.subr.mxu0 0.0
        %1079 = vmatpush1.msra.mxu0 %v975
        %1080 = vmatprep.subr.mxu0 0.0
        %1081 = vmatpush1.msra.mxu0 %v974
        %1082 = vmatprep.subr.mxu0 0.0
        %1083 = vmatpush1.msra.mxu0 %v973
        %1084 = vmatprep.subr.mxu0 0.0
        %1085 = vmatpush1.msra.mxu0 %v972
        %1086 = vmatprep.subr.mxu0 0.0
        %1087 = vmatpush1.msra.mxu0 %v971
        %1088 = vmatprep.subr.mxu0 0.0
        %1089 = vmatpush1.msra.mxu0 %v970
        %1090 = vmatprep.subr.mxu0 0.0
        %1091 = vmatpush1.msra.mxu0 %v969
        %1092 = vmatprep.subr.mxu0 0.0
        %1093 = vmatpush1.msra.mxu0 %v968
        %1094 = vmatprep.subr.mxu0 0.0
        %1095 = vmatpush1.msra.mxu0 %v967
        %1096 = vmatprep.subr.mxu0 0.0
        %1097 = vmatpush1.msra.mxu0 %v966
        %1098 = vmatprep.subr.mxu0 0.0
        %1099 = vmatpush1.msra.mxu0 %v965
        %1100 = vmatprep.subr.mxu0 0.0
        %1101 = vmatpush1.msra.mxu0 %v964
        %1102 = vmatprep.subr.mxu0 0.0
        %1103 = vmatpush1.msra.mxu0 %v963
        %1104 = vmatprep.subr.mxu0 0.0
        %1105 = vmatpush1.msra.mxu0 %v962
        %1106 = vmatprep.subr.mxu0 0.0
        %1107 = vmatpush1.msra.mxu0 %v961
        %1108 = vmatprep.subr.mxu0 0.0
        %1109 = vmatpush2.msra.mxu0 %v992
        %1110 = vmatprep.subr.mxu0 0.0
        %1111 = vmatpush2.msra.mxu0 %v991
        %1112 = vmatprep.subr.mxu0 0.0
        %1113 = vmatpush2.msra.mxu0 %v990
        %1114 = vmatprep.subr.mxu0 0.0
        %1115 = vmatpush2.msra.mxu0 %v989
        %1116 = vmatprep.subr.mxu0 0.0
        %1117 = vmatpush2.msra.mxu0 %v988
        %1118 = vmatprep.subr.mxu0 0.0
        %1119 = vmatpush2.msra.mxu0 %v987
        %1120 = vmatprep.subr.mxu0 0.0
        %1121 = vmatpush2.msra.mxu0 %v986
        %1122 = vmatprep.subr.mxu0 0.0
        %1123 = vmatpush2.msra.mxu0 %v985
        %1124 = vmatprep.subr.mxu0 0.0
        %1125 = vmatpush2.msra.mxu0 %v984
        %1126 = vmatprep.subr.mxu0 0.0
        %1127 = vmatpush2.msra.mxu0 %v983
        %1128 = vmatprep.subr.mxu0 0.0
        %1129 = vmatpush2.msra.mxu0 %v982
        %1130 = vmatprep.subr.mxu0 0.0
        %1131 = vmatpush2.msra.mxu0 %v981
        %1132 = vmatprep.subr.mxu0 0.0
        %1133 = vmatpush2.msra.mxu0 %v980
        %1134 = vmatprep.subr.mxu0 0.0
        %1135 = vmatpush2.msra.mxu0 %v979
        %1136 = vmatprep.subr.mxu0 0.0
        %1137 = vmatpush2.msra.mxu0 %v978
        %1138 = vmatprep.subr.mxu0 0.0
        %1139 = vmatpush2.msra.mxu0 %v977
        %1140 = vmatprep.mubr.f32.mxu0 %v1001
        %1141 = vmatmul.mubr.f32.gmra.mxu0 %v997
        %v1142 = vpop.f32.mrf.mxu0
        %v1143 = vadd.f32 0.0, %v1142
        %v1144 = vpop.f32.mrf.mxu0
        %1145 = vdwg.mxu0
        %v1146 = vmax.f32 %v1143, 1e-05
        %v1147 = vrcp.pop %v1146
        %v1148 = vmul.f32 %v1073, %v1147
        %vm1149 = vcmp.lt.f32.partialorder %v1143, 0.5
        %v1150 = vsel %vm1149, 0.0, %v1148
        %vm1151 = vcmask 122880
        %1152 = vst.msk [vmem:[%s271] sm:$0x1] %vm1151, %v1150
        %s1153 = sand.u32 %s166, 1
        %s1154 = scalar_lea.sflag [#allocation3], %s1153
        %s1155 = sand.u32 %s166, 1
        %s1156 = scalar_lea.vmem [#allocation2], %s1155
        // Predicated region
        $region41: #{tpu_custom_call.1} parent=39 // pred_check
          %p1157 = pneg %p176
        $region42: #{tpu_custom_call.1} parent=39 // pred_check_branch
          %1159 = sbr.rel (%p1157) target = $region44
        $region43: #{tpu_custom_call.1} parent=39 // pred_region
          %s1161 = ssub.s32 16, 16
          %1162 = vsyncadd %s1154, %s1161
          %s1163 = sadd.s32 %s24, %s23
          %s1164 = smul.addr %s1163, 16
          %s1165 = scalar_lea.hbm %s5, %s1164
          %s1167 = sshll.u32 %s1156, 4
          %s1168 = int_to_ptr.vmem [resolvable:$true] %s1167
          %1170 = dma.vmem_to_hbm [thread:$0]  %s1168, 16, %s1165, %s1154
        $region44: #{tpu_custom_call.1} parent=39 // pred_fallthru
          _
      $region40: #{tpu_custom_call.1} parent=5 // pred_fallthru
        _
      %p1171 = scmp.le.s32.totalorder 2, %s14
      // Predicated region
      $region45: #{tpu_custom_call.1} parent=5 // pred_check
        %p1172 = pneg %p1171
      $region46: #{tpu_custom_call.1} parent=5 // pred_check_branch
        %1174 = sbr.rel (%p1172) target = $region48
      $region47: #{tpu_custom_call.1} parent=5 // pred_region
        %s1175 = ssub.s32 %s14, 2
        // Predicated region
        $region49: #{tpu_custom_call.1} parent=47 // pred_check
          %p1176 = pneg %p182
        $region50: #{tpu_custom_call.1} parent=47 // pred_check_branch
          %1178 = sbr.rel (%p1176) target = $region52
        $region51: #{tpu_custom_call.1} parent=47 // pred_region
          %s1179 = sand.u32 %s167, 1
          %s1180 = scalar_lea.sflag [#allocation3], %s1179
          %s1181 = sand.u32 %s167, 1
          %s1182 = scalar_lea.vmem [#allocation2], %s1181
          %1183 = dma.done %s1180, 16
        $region52: #{tpu_custom_call.1} parent=47 // pred_fallthru
          _
      $region48: #{tpu_custom_call.1} parent=5 // pred_fallthru
        _
    $region6: #{tpu_custom_call.1} parent=1 // loop_footer
      %s18 = sadd.s32 1, %s14
    $region7: #{tpu_custom_call.1} parent=1 // loop_footer_branch
      %13 = sbr.rel target = $region3
    $region8: #{tpu_custom_call.1} parent=1 // loop_exit
      _
    %1184 = vsyncpa [#allocation3], 1
    %s1185 = scalar_lea.sflag [#allocation3], 1
    %1186 = vsyncpa %s1185, 1

</llo_original>
